<compile_context>
chip_gen: v7x
topology: tpu7x:2x2x1
jax: 0.10.0
libtpu: 0.0.40
codegen_flags: <defaults>
</compile_context>

<pallas_src>
import numpy as np
import jax
import jax.numpy as jnp
from jax.experimental import pallas as pl
from jax.experimental.pallas import tpu as pltpu

SEQ_LEN = 16          # stands in for data.X_train.shape[1]
OUT_LANES = 128       # replicated logit columns -> unmasked lane-dense stores


def _round_up(x, m):
    return ((x + m - 1) // m) * m


def _vmem_budget_bytes(bt):
    """Per-step VMEM footprint estimate (with slack), clamped to a sane range."""
    f32, bf16 = 4, 2
    live_f32 = bt * (256 + 512 + 128 + 64 + 128) * f32       # f32 intermediates
    live_bf16 = bt * (16 + 256 + 512 + 128 + 64) * bf16      # bf16 matmul operands
    io = 2 * bt * SEQ_LEN * f32 + 2 * bt * OUT_LANES * bf16  # double-buffered x/out
    weights = 640 * 1024                                     # resident, single-buffered
    est = 2 * (live_f32 + live_bf16) + io + weights          # 2x slack for temporaries
    return int(min(max(est, 32 * 1024 * 1024), 100 * 1024 * 1024))


# ----------------------------------------------------------------------------
# Kernel: five plain 2-D matmuls (bf16 operands, f32 accumulation) + bias/relu
# in f32 + EUP sigmoid, on one batch tile.
# ----------------------------------------------------------------------------
def phishing_kernel(x_ref, m1_ref, b1_ref, m2_ref, b2_ref,
                    wf1_ref, bf1_ref, wf2_ref, bf2_ref, wf3_ref, bf3_ref,
                    out_ref):
    bf16 = jnp.bfloat16

    # conv1 (kernel=3, pad=1, Cin=1, Cout=16) as banded matmul: (Bt,16)@(16,256)
    h = jnp.dot(x_ref[...].astype(bf16), m1_ref[...],
                preferred_element_type=jnp.float32)
    h = jnp.maximum(h + b1_ref[...], 0.0)

    # conv2 (kernel=3, pad=1, Cin=16, Cout=32) as banded matmul: (Bt,256)@(256,512)
    h = jnp.dot(h.astype(bf16), m2_ref[...], preferred_element_type=jnp.float32)
    h = jnp.maximum(h + b2_ref[...], 0.0)

    # fc1: single K=512 contraction (weight pre-regrouped to match PyTorch flatten)
    h = jnp.dot(h.astype(bf16), wf1_ref[...], preferred_element_type=jnp.float32)
    h = jnp.maximum(h + bf1_ref[...], 0.0)

    # dropout(p=0.5) == identity at inference time

    # fc2: (Bt,128)@(128,64)
    h = jnp.dot(h.astype(bf16), wf2_ref[...], preferred_element_type=jnp.float32)
    h = jnp.maximum(h + bf2_ref[...], 0.0)

    # fc3 with its single output column replicated across 128 lanes so the final
    # store is a full, unmasked lane-dense (Bt, 128) slab.
    logits = jnp.dot(h.astype(bf16), wf3_ref[...],
                     preferred_element_type=jnp.float32) + bf3_ref[...]

    # sigmoid = 1 / (1 + exp(-x)): exp and approx-reciprocal both ride the EUP
    # slot, keeping VPU slots free.
    t = jnp.exp(-logits)
    out_ref[...] = pl.reciprocal(1.0 + t, approx=True).astype(out_ref.dtype)


# ----------------------------------------------------------------------------
# One-time parameter re-layout (hoisted out of the per-call path).
# ----------------------------------------------------------------------------
def prepare_params(params, L):
    """Fold the convs into banded matrices, regroup FC weights, cast MXU operands
    to bf16 (biases stay f32).  Runs once at load time."""
    w1, b1, w2, b2, wf1, bf1, wf2, bf2, wf3, bf3 = [np.asarray(p, np.float32)
                                                    for p in params]
    C1, C2 = w1.shape[0], w2.shape[0]          # 16, 32
    F1 = wf1.shape[0]                          # 128

    # conv1: h1_flat[b, l*C1 + co] = sum_lp x[b, lp] * M1[lp, l*C1 + co]
    M1 = np.zeros((L, L * C1), np.float32)
    # conv2: h2_flat[b, l*C2 + co] = sum_{lp,ci} h1_flat[b, lp*C1+ci] * M2[lp*C1+ci, l*C2+co]
    M2 = np.zeros((L * C1, L * C2), np.float32)
    for l in range(L):
        for k in range(3):
            lp = l + k - 1                      # 'same' padding=1
            if 0 <= lp < L:
                M1[lp, l * C1:(l + 1) * C1] = w1[:, 0, k]
                M2[lp * C1:(lp + 1) * C1, l * C2:(l + 1) * C2] = w2[:, :, k].T

    b1f = np.tile(b1, L)[None, :]               # (1, L*16)
    b2f = np.tile(b2, L)[None, :]               # (1, L*32)

    # PyTorch flattens (B, 32, L) with feature index c*L + l; our flat activations
    # use index l*32 + c, so regroup fc1's weight accordingly -> (512, 128).
    Wfc1 = np.transpose(wf1.reshape(F1, C2, L), (2, 1, 0)).reshape(L * C2, F1)
    Wfc2 = wf2.T                                # (128, 64)
    Wfc3 = np.tile(wf3.T, (1, OUT_LANES))       # (64, 128)  replicated columns
    bf3r = np.tile(bf3.reshape(1, 1), (1, OUT_LANES))

    prepped = (M1, b1f, M2, b2f,
               Wfc1, bf1[None, :], Wfc2, bf2[None, :], Wfc3, bf3r)
    bf16_idx = (0, 2, 4, 6, 8)                  # matmul weights -> bf16 MXU operands
    return tuple(jnp.asarray(a, jnp.bfloat16 if i in bf16_idx else jnp.float32)
                 for i, a in enumerate(prepped))


# ----------------------------------------------------------------------------
# Wrapper: batch-tiled pallas_call with pipelined x/out and resident weights.
# ----------------------------------------------------------------------------
def phishing_forward(x, prepped, *, b_tile=2048):
    assert b_tile % 8 == 0
    B, L = x.shape

    bt = min(b_tile, _round_up(B, 8))           # small batches -> small single tile
    # Keep the grid >= 2 steps whenever the batch can fill two tiles so both v7x
    # TensorCores get work under "parallel"; harmless on single-TC v5e/v6e.
    b8 = _round_up(B, 8)
    if b8 >= 16:
        bt = min(bt, _round_up((b8 + 1) // 2, 8))
    Bp = _round_up(B, bt)
    if Bp != B:
        x = jnp.pad(x, ((0, Bp - B), (0, 0)))
    grid = (Bp // bt,)

    def resident(a):
        # Whole array, same block every step -> single-buffered (no 2x VMEM waste).
        return pl.BlockSpec(a.shape, lambda i: (0, 0),
                            pipeline_mode=pl.Buffered(1))

    in_specs = [pl.BlockSpec((bt, L), lambda i: (i, 0))] + [resident(a) for a in prepped]
    out_specs = pl.BlockSpec((bt, OUT_LANES), lambda i: (i, 0))

    out = pl.pallas_call(
        phishing_kernel,
        out_shape=jax.ShapeDtypeStruct((Bp, OUT_LANES), jnp.bfloat16),
        grid=grid,
        in_specs=in_specs,
        out_specs=out_specs,
        compiler_params=pltpu.CompilerParams(
            dimension_semantics=("parallel",),
            vmem_limit_bytes=_vmem_budget_bytes(bt)),
    )(x, *prepped)

    # TODO(synk): lane-pack one real logit per lane (in-kernel 128-row transpose)
    # to eliminate the replicated-slab slice entirely.
    return out[:B, :1].astype(jnp.float32)      # drop padding + replicated lanes


# ----------------------------------------------------------------------------
# Init + pure-JAX reference (mirrors the PyTorch forward exactly, NCL convs).
# ----------------------------------------------------------------------------
def init_params(key, L):
    ks = jax.random.split(key, 10)

    def u(k, shape, fan_in):
        bound = 1.0 / (fan_in ** 0.5)
        return jax.random.uniform(k, shape, jnp.float32, -bound, bound)

    w1 = u(ks[0], (16, 1, 3), 1 * 3)
    b1 = u(ks[1], (16,), 1 * 3)
    w2 = u(ks[2], (32, 16, 3), 16 * 3)
    b2 = u(ks[3], (32,), 16 * 3)
    wf1 = u(ks[4], (128, 32 * L), 32 * L)
    bf1 = u(ks[5], (128,), 32 * L)
    wf2 = u(ks[6], (64, 128), 128)
    bf2 = u(ks[7], (64,), 128)
    wf3 = u(ks[8], (1, 64), 64)
    bf3 = u(ks[9], (1,), 64)
    return (w1, b1, w2, b2, wf1, bf1, wf2, bf2, wf3, bf3)


def reference_forward(x, params):
    w1, b1, w2, b2, wf1, bf1, wf2, bf2, wf3, bf3 = params
    h = x[:, None, :]                            # (B, 1, L)

    def conv(h, w, b):
        out = jax.lax.conv_general_dilated(
            h, w, window_strides=(1,), padding=((1, 1),),
            dimension_numbers=('NCH', 'OIH', 'NCH'))
        return out + b[None, :, None]

    h = jax.nn.relu(conv(h, w1, b1))
    h = jax.nn.relu(conv(h, w2, b2))
    h = h.reshape(h.shape[0], -1)                # (B, 32*L), PyTorch flatten order
    h = jax.nn.relu(h @ wf1.T + bf1)
    h = jax.nn.relu(h @ wf2.T + bf2)             # dropout = identity (eval)
    return jax.nn.sigmoid(h @ wf3.T + bf3)


if __name__ == "__main__":
    L = SEQ_LEN
    key = jax.random.PRNGKey(0)
    kx, kp, kx2 = jax.random.split(key, 3)
    params = init_params(kp, L)
    prepped = prepare_params(params, L)          # one-time weight re-layout / bf16 cast

    # Small demo batch (single grid step).
    B = 2
    x = jax.random.normal(kx, (B, L), jnp.float32)
    out = phishing_forward(x, prepped)
    jax.block_until_ready(out)
    ref = reference_forward(x, params)
    assert out.shape == (B, 1), out.shape
    # bf16 MXU operands + bf16 output slab -> looser tolerance than the f32 path.
    assert jnp.allclose(out, ref, atol=3e-2, rtol=3e-2), (out, ref)

    # Larger, non-multiple batch to exercise the pipelined multi-step grid + padding.
    B2 = 1000
    x2 = jax.random.normal(kx2, (B2, L), jnp.float32)
    out2 = phishing_forward(x2, prepped, b_tile=256)   # grid = (4,)
    jax.block_until_ready(out2)
    ref2 = reference_forward(x2, params)
    assert out2.shape == (B2, 1), out2.shape
    assert jnp.allclose(out2, ref2, atol=3e-2, rtol=3e-2)

    print("KERNEL_OK")
</pallas_src>

<mosaic_0001>
module attributes {stable_mosaic.version = 11 : i64} {
  func.func @phishing_kernel(%arg0: i32, %arg1: memref<8x16xf32, #tpu.memory_space<vmem>>, %arg2: memref<16x256xbf16, #tpu.memory_space<vmem>>, %arg3: memref<1x256xf32, #tpu.memory_space<vmem>>, %arg4: memref<256x512xbf16, #tpu.memory_space<vmem>>, %arg5: memref<1x512xf32, #tpu.memory_space<vmem>>, %arg6: memref<512x128xbf16, #tpu.memory_space<vmem>>, %arg7: memref<1x128xf32, #tpu.memory_space<vmem>>, %arg8: memref<128x64xbf16, #tpu.memory_space<vmem>>, %arg9: memref<1x64xf32, #tpu.memory_space<vmem>>, %arg10: memref<64x128xbf16, #tpu.memory_space<vmem>>, %arg11: memref<1x128xf32, #tpu.memory_space<vmem>>, %arg12: memref<8x128xbf16, #tpu.memory_space<vmem>>) attributes {dimension_semantics = [#tpu.dimension_semantics<parallel>], iteration_bounds = array<i64: 1>, scalar_prefetch = 0 : i64, scratch_operands = 0 : i64, tpu.core_type = #tpu.core_type<tc>, window_params = [{transform_indices = @transform_0, window_bounds = array<i64: 8, 16>}, {pipeline_mode = #tpu.pipeline_mode<synchronous>, transform_indices = @transform_1, window_bounds = array<i64: 16, 256>}, {pipeline_mode = #tpu.pipeline_mode<synchronous>, transform_indices = @transform_2, window_bounds = array<i64: 1, 256>}, {pipeline_mode = #tpu.pipeline_mode<synchronous>, transform_indices = @transform_3, window_bounds = array<i64: 256, 512>}, {pipeline_mode = #tpu.pipeline_mode<synchronous>, transform_indices = @transform_4, window_bounds = array<i64: 1, 512>}, {pipeline_mode = #tpu.pipeline_mode<synchronous>, transform_indices = @transform_5, window_bounds = array<i64: 512, 128>}, {pipeline_mode = #tpu.pipeline_mode<synchronous>, transform_indices = @transform_6, window_bounds = array<i64: 1, 128>}, {pipeline_mode = #tpu.pipeline_mode<synchronous>, transform_indices = @transform_7, window_bounds = array<i64: 128, 64>}, {pipeline_mode = #tpu.pipeline_mode<synchronous>, transform_indices = @transform_8, window_bounds = array<i64: 1, 64>}, {pipeline_mode = #tpu.pipeline_mode<synchronous>, transform_indices = @transform_9, window_bounds = array<i64: 64, 128>}, {pipeline_mode = #tpu.pipeline_mode<synchronous>, transform_indices = @transform_10, window_bounds = array<i64: 1, 128>}, {transform_indices = @transform_11, window_bounds = array<i64: 8, 128>}]} {
    %c0 = arith.constant 0 : index
    %c0_0 = arith.constant 0 : index
    %0 = vector.load %arg1[%c0, %c0_0] : memref<8x16xf32, #tpu.memory_space<vmem>>, vector<8x16xf32>
    %1 = arith.truncf %0 : vector<8x16xf32> to vector<8x16xbf16>
    %c0_1 = arith.constant 0 : index
    %c0_2 = arith.constant 0 : index
    %2 = vector.load %arg2[%c0_1, %c0_2] : memref<16x256xbf16, #tpu.memory_space<vmem>>, vector<16x256xbf16>
    %cst = arith.constant dense<0.000000e+00> : vector<8x256xf32>
    %3 = tpu.matmul %1, %2, %cst {dimension_numbers = #tpu.dot_dimension_numbers<[1], [0], [0], [1], [0, 0, 1, 1], [], []>} : vector<8x16xbf16>, vector<16x256xbf16>, vector<8x256xf32> -> vector<8x256xf32>
    %c0_3 = arith.constant 0 : index
    %c0_4 = arith.constant 0 : index
    %4 = vector.load %arg3[%c0_3, %c0_4] : memref<1x256xf32, #tpu.memory_space<vmem>>, vector<1x256xf32>
    %5 = vector.broadcast %4 : vector<1x256xf32> to vector<8x256xf32>
    %6 = arith.addf %3, %5 : vector<8x256xf32>
    %cst_5 = arith.constant 0.000000e+00 : f32
    %7 = vector.broadcast %cst_5 : f32 to vector<8x256xf32>
    %8 = arith.maximumf %6, %7 : vector<8x256xf32>
    %9 = arith.truncf %8 : vector<8x256xf32> to vector<8x256xbf16>
    %c0_6 = arith.constant 0 : index
    %c0_7 = arith.constant 0 : index
    %10 = vector.load %arg4[%c0_6, %c0_7] : memref<256x512xbf16, #tpu.memory_space<vmem>>, vector<256x512xbf16>
    %cst_8 = arith.constant dense<0.000000e+00> : vector<8x512xf32>
    %11 = tpu.matmul %9, %10, %cst_8 {dimension_numbers = #tpu.dot_dimension_numbers<[1], [0], [0], [1], [0, 0, 1, 1], [], []>} : vector<8x256xbf16>, vector<256x512xbf16>, vector<8x512xf32> -> vector<8x512xf32>
    %c0_9 = arith.constant 0 : index
    %c0_10 = arith.constant 0 : index
    %12 = vector.load %arg5[%c0_9, %c0_10] : memref<1x512xf32, #tpu.memory_space<vmem>>, vector<1x512xf32>
    %13 = vector.broadcast %12 : vector<1x512xf32> to vector<8x512xf32>
    %14 = arith.addf %11, %13 : vector<8x512xf32>
    %cst_11 = arith.constant 0.000000e+00 : f32
    %15 = vector.broadcast %cst_11 : f32 to vector<8x512xf32>
    %16 = arith.maximumf %14, %15 : vector<8x512xf32>
    %17 = arith.truncf %16 : vector<8x512xf32> to vector<8x512xbf16>
    %c0_12 = arith.constant 0 : index
    %c0_13 = arith.constant 0 : index
    %18 = vector.load %arg6[%c0_12, %c0_13] : memref<512x128xbf16, #tpu.memory_space<vmem>>, vector<512x128xbf16>
    %cst_14 = arith.constant dense<0.000000e+00> : vector<8x128xf32>
    %19 = tpu.matmul %17, %18, %cst_14 {dimension_numbers = #tpu.dot_dimension_numbers<[1], [0], [0], [1], [0, 0, 1, 1], [], []>} : vector<8x512xbf16>, vector<512x128xbf16>, vector<8x128xf32> -> vector<8x128xf32>
    %c0_15 = arith.constant 0 : index
    %c0_16 = arith.constant 0 : index
    %20 = vector.load %arg7[%c0_15, %c0_16] : memref<1x128xf32, #tpu.memory_space<vmem>>, vector<1x128xf32>
    %21 = vector.broadcast %20 : vector<1x128xf32> to vector<8x128xf32>
    %22 = arith.addf %19, %21 : vector<8x128xf32>
    %cst_17 = arith.constant 0.000000e+00 : f32
    %23 = vector.broadcast %cst_17 : f32 to vector<8x128xf32>
    %24 = arith.maximumf %22, %23 : vector<8x128xf32>
    %25 = arith.truncf %24 : vector<8x128xf32> to vector<8x128xbf16>
    %c0_18 = arith.constant 0 : index
    %c0_19 = arith.constant 0 : index
    %26 = vector.load %arg8[%c0_18, %c0_19] : memref<128x64xbf16, #tpu.memory_space<vmem>>, vector<128x64xbf16>
    %cst_20 = arith.constant dense<0.000000e+00> : vector<8x64xf32>
    %27 = tpu.matmul %25, %26, %cst_20 {dimension_numbers = #tpu.dot_dimension_numbers<[1], [0], [0], [1], [0, 0, 1, 1], [], []>} : vector<8x128xbf16>, vector<128x64xbf16>, vector<8x64xf32> -> vector<8x64xf32>
    %c0_21 = arith.constant 0 : index
    %c0_22 = arith.constant 0 : index
    %28 = vector.load %arg9[%c0_21, %c0_22] : memref<1x64xf32, #tpu.memory_space<vmem>>, vector<1x64xf32>
    %29 = vector.broadcast %28 : vector<1x64xf32> to vector<8x64xf32>
    %30 = arith.addf %27, %29 : vector<8x64xf32>
    %cst_23 = arith.constant 0.000000e+00 : f32
    %31 = vector.broadcast %cst_23 : f32 to vector<8x64xf32>
    %32 = arith.maximumf %30, %31 : vector<8x64xf32>
    %33 = arith.truncf %32 : vector<8x64xf32> to vector<8x64xbf16>
    %c0_24 = arith.constant 0 : index
    %c0_25 = arith.constant 0 : index
    %34 = vector.load %arg10[%c0_24, %c0_25] : memref<64x128xbf16, #tpu.memory_space<vmem>>, vector<64x128xbf16>
    %cst_26 = arith.constant dense<0.000000e+00> : vector<8x128xf32>
    %35 = tpu.matmul %33, %34, %cst_26 {dimension_numbers = #tpu.dot_dimension_numbers<[1], [0], [0], [1], [0, 0, 1, 1], [], []>} : vector<8x64xbf16>, vector<64x128xbf16>, vector<8x128xf32> -> vector<8x128xf32>
    %c0_27 = arith.constant 0 : index
    %c0_28 = arith.constant 0 : index
    %36 = vector.load %arg11[%c0_27, %c0_28] : memref<1x128xf32, #tpu.memory_space<vmem>>, vector<1x128xf32>
    %37 = vector.broadcast %36 : vector<1x128xf32> to vector<8x128xf32>
    %38 = arith.addf %35, %37 : vector<8x128xf32>
    %cst_29 = arith.constant 0.000000e+00 : f32
    %39 = vector.broadcast %cst_29 : f32 to vector<8x128xf32>
    %40 = arith.subf %39, %38 : vector<8x128xf32>
    %41 = math.exp %40 : vector<8x128xf32>
    %cst_30 = arith.constant 1.000000e+00 : f32
    %42 = vector.broadcast %cst_30 : f32 to vector<8x128xf32>
    %43 = arith.addf %42, %41 : vector<8x128xf32>
    %44 = tpu.reciprocal %43 {approx = true} : vector<8x128xf32> -> vector<8x128xf32>
    %45 = arith.truncf %44 : vector<8x128xf32> to vector<8x128xbf16>
    %c0_31 = arith.constant 0 : index
    %c0_32 = arith.constant 0 : index
    %46 = vector.load %arg12[%c0_31, %c0_32] : memref<8x128xbf16, #tpu.memory_space<vmem>>, vector<8x128xbf16>
    tpu.vector_store %arg12[%c0_31, %c0_32], %45 {strides = array<i32>} : memref<8x128xbf16, #tpu.memory_space<vmem>>, vector<8x128xbf16>,
    return
  }
  func.func @transform_0(%arg0: i32) -> (i32, i32) {
    %c0_i32 = arith.constant 0 : i32
    %c0_i32_0 = arith.constant 0 : i32
    return %arg0, %c0_i32 : i32, i32
  }
  func.func @transform_1(%arg0: i32) -> (i32, i32) {
    %c0_i32 = arith.constant 0 : i32
    %c0_i32_0 = arith.constant 0 : i32
    %c0_i32_1 = arith.constant 0 : i32
    return %c0_i32, %c0_i32_0 : i32, i32
  }
  func.func @transform_2(%arg0: i32) -> (i32, i32) {
    %c0_i32 = arith.constant 0 : i32
    %c0_i32_0 = arith.constant 0 : i32
    %c0_i32_1 = arith.constant 0 : i32
    return %c0_i32, %c0_i32_0 : i32, i32
  }
  func.func @transform_3(%arg0: i32) -> (i32, i32) {
    %c0_i32 = arith.constant 0 : i32
    %c0_i32_0 = arith.constant 0 : i32
    %c0_i32_1 = arith.constant 0 : i32
    return %c0_i32, %c0_i32_0 : i32, i32
  }
  func.func @transform_4(%arg0: i32) -> (i32, i32) {
    %c0_i32 = arith.constant 0 : i32
    %c0_i32_0 = arith.constant 0 : i32
    %c0_i32_1 = arith.constant 0 : i32
    return %c0_i32, %c0_i32_0 : i32, i32
  }
  func.func @transform_5(%arg0: i32) -> (i32, i32) {
    %c0_i32 = arith.constant 0 : i32
    %c0_i32_0 = arith.constant 0 : i32
    %c0_i32_1 = arith.constant 0 : i32
    return %c0_i32, %c0_i32_0 : i32, i32
  }
  func.func @transform_6(%arg0: i32) -> (i32, i32) {
    %c0_i32 = arith.constant 0 : i32
    %c0_i32_0 = arith.constant 0 : i32
    %c0_i32_1 = arith.constant 0 : i32
    return %c0_i32, %c0_i32_0 : i32, i32
  }
  func.func @transform_7(%arg0: i32) -> (i32, i32) {
    %c0_i32 = arith.constant 0 : i32
    %c0_i32_0 = arith.constant 0 : i32
    %c0_i32_1 = arith.constant 0 : i32
    return %c0_i32, %c0_i32_0 : i32, i32
  }
  func.func @transform_8(%arg0: i32) -> (i32, i32) {
    %c0_i32 = arith.constant 0 : i32
    %c0_i32_0 = arith.constant 0 : i32
    %c0_i32_1 = arith.constant 0 : i32
    return %c0_i32, %c0_i32_0 : i32, i32
  }
  func.func @transform_9(%arg0: i32) -> (i32, i32) {
    %c0_i32 = arith.constant 0 : i32
    %c0_i32_0 = arith.constant 0 : i32
    %c0_i32_1 = arith.constant 0 : i32
    return %c0_i32, %c0_i32_0 : i32, i32
  }
  func.func @transform_10(%arg0: i32) -> (i32, i32) {
    %c0_i32 = arith.constant 0 : i32
    %c0_i32_0 = arith.constant 0 : i32
    %c0_i32_1 = arith.constant 0 : i32
    return %c0_i32, %c0_i32_0 : i32, i32
  }
  func.func @transform_11(%arg0: i32) -> (i32, i32) {
    %c0_i32 = arith.constant 0 : i32
    %c0_i32_0 = arith.constant 0 : i32
    return %arg0, %c0_i32 : i32, i32
  }
}

</mosaic_0001>

<llo_original>
// kernel: tpu_custom_call.1
$region0: #{tpu_custom_call.1}
  #allocation0 [shape = 'u32[]', space=smem, size = 0x4, offset = 0x4, fixed_abs, tag = 'smem constant byte address 0x4 - core index']
  #allocation1 [shape = 'u32[144,128]{1,0:T(1,128)}', space=vmem, size = 0x12000, scoped, tag = 'internal scratch']
  %s0 = inlined_call_operand.vmem [shape: f32[8,16], index: 0, kind: input, shape index: {}]
  %s1 = inlined_call_operand.vmem [shape: bf16[16,256], index: 1, kind: input, shape index: {}]
  %s2 = inlined_call_operand.vmem [shape: f32[1,256], index: 2, kind: input, shape index: {}]
  %s3 = inlined_call_operand.hbm [shape: bf16[256,512], index: 3, kind: input, shape index: {}]
  %s4 = inlined_call_operand.vmem [shape: f32[1,512], index: 4, kind: input, shape index: {}]
  %s5 = inlined_call_operand.hbm [shape: bf16[512,128], index: 5, kind: input, shape index: {}]
  %s6 = inlined_call_operand.vmem [shape: f32[1,128], index: 6, kind: input, shape index: {}]
  %s7 = inlined_call_operand.vmem [shape: bf16[128,64], index: 7, kind: input, shape index: {}]
  %s8 = inlined_call_operand.vmem [shape: f32[1,64], index: 8, kind: input, shape index: {}]
  %s9 = inlined_call_operand.vmem [shape: bf16[64,128], index: 9, kind: input, shape index: {}]
  %s10 = inlined_call_operand.vmem [shape: f32[1,128], index: 10, kind: input, shape index: {}]
  %s11 = inlined_call_operand.hbm [shape: bf16[8,128], index: 11, kind: output, shape index: {}]
  %s12 = sld [smem:[#allocation0]]
  $region62: #{tpu_custom_call.1} parent=0
    _
  %s14 = ssub.s32 1, %s12
  %s15 = scalar_select 0, %s14, %s12
  $region1: #{tpu_custom_call.1} parent=0
    #allocation2 [shape = 'u8[262144]{0}', space=vmem, size = 0x40000, scoped, tag = 'input window, operand 3, single buffered']
    #allocation3 [shape = 's32[1]{0}', space=sflag, size = 0x4, scoped, tag = 'scoped memory for tpu_custom_call.1']
    #allocation4 [shape = 's32[1]{0}', space=sflag, size = 0x4, scoped, tag = 'scoped memory for tpu_custom_call.1']
    #allocation5 [shape = 'u8[131072]{0}', space=vmem, size = 0x20000, scoped, tag = 'input window, operand 5, single buffered']
    #allocation6 [shape = 's32[1]{0}', space=sflag, size = 0x4, scoped, tag = 'scoped memory for tpu_custom_call.1']
    #allocation7 [shape = 'u8[2048]{0}', space=vmem, size = 0x800, scoped, tag = 'output window, operand 0, single buffered']
    %16 = vsyncpa [#allocation3], 0
    %17 = vsyncpa [#allocation6], 0
    %18 = vsyncpa [#allocation4], 0
    // Predicated region
    $region2: #{tpu_custom_call.1} parent=1 // pred_check
      _
    $region3: #{tpu_custom_call.1} parent=1 // pred_check_branch
      %20 = sbr.rel (0) target = $region5
    $region4: #{tpu_custom_call.1} parent=1 // pred_region
      _
    $region5: #{tpu_custom_call.1} parent=1 // pred_fallthru
      _
    // Predicated region
    $region6: #{tpu_custom_call.1} parent=1 // pred_check
      _
    $region7: #{tpu_custom_call.1} parent=1 // pred_check_branch
      %22 = sbr.rel (0) target = $region9
    $region8: #{tpu_custom_call.1} parent=1 // pred_region
      _
    $region9: #{tpu_custom_call.1} parent=1 // pred_fallthru
      _
    // Predicated region
    $region10: #{tpu_custom_call.1} parent=1 // pred_check
      _
    $region11: #{tpu_custom_call.1} parent=1 // pred_check_branch
      %24 = sbr.rel (0) target = $region13
    $region12: #{tpu_custom_call.1} parent=1 // pred_region
      _
    $region13: #{tpu_custom_call.1} parent=1 // pred_fallthru
      _
    // Predicated region
    $region14: #{tpu_custom_call.1} parent=1 // pred_check
      _
    $region15: #{tpu_custom_call.1} parent=1 // pred_check_branch
      %26 = sbr.rel (0) target = $region17
    $region16: #{tpu_custom_call.1} parent=1 // pred_region
      %s28 = ssub.s32 8192, 8192
      %29 = vsyncadd [#allocation3], %s28
      %s30 = sshll.u32 [#allocation2], 4
      %s31 = int_to_ptr.vmem [resolvable:$true] %s30
      %36 = dma.hbm_to_vmem [thread:$0]  %s3, 8192, %s31, [#allocation3], 256, 256, 16
    $region17: #{tpu_custom_call.1} parent=1 // pred_fallthru
      _
    // Predicated region
    $region18: #{tpu_custom_call.1} parent=1 // pred_check
      _
    $region19: #{tpu_custom_call.1} parent=1 // pred_check_branch
      %38 = sbr.rel (0) target = $region21
    $region20: #{tpu_custom_call.1} parent=1 // pred_region
      _
    $region21: #{tpu_custom_call.1} parent=1 // pred_fallthru
      _
    // Predicated region
    $region22: #{tpu_custom_call.1} parent=1 // pred_check
      _
    $region23: #{tpu_custom_call.1} parent=1 // pred_check_branch
      %40 = sbr.rel (0) target = $region25
    $region24: #{tpu_custom_call.1} parent=1 // pred_region
      %s42 = ssub.s32 4096, 4096
      %43 = vsyncadd [#allocation6], %s42
      %s44 = sshll.u32 [#allocation5], 4
      %s45 = int_to_ptr.vmem [resolvable:$true] %s44
      %50 = dma.hbm_to_vmem [thread:$0]  %s5, 4096, %s45, [#allocation6], 64, 64, 4
    $region25: #{tpu_custom_call.1} parent=1 // pred_fallthru
      _
    // Predicated region
    $region26: #{tpu_custom_call.1} parent=1 // pred_check
      _
    $region27: #{tpu_custom_call.1} parent=1 // pred_check_branch
      %52 = sbr.rel (0) target = $region29
    $region28: #{tpu_custom_call.1} parent=1 // pred_region
      _
    $region29: #{tpu_custom_call.1} parent=1 // pred_fallthru
      _
    // Predicated region
    $region30: #{tpu_custom_call.1} parent=1 // pred_check
      _
    $region31: #{tpu_custom_call.1} parent=1 // pred_check_branch
      %54 = sbr.rel (0) target = $region33
    $region32: #{tpu_custom_call.1} parent=1 // pred_region
      _
    $region33: #{tpu_custom_call.1} parent=1 // pred_fallthru
      _
    // Predicated region
    $region34: #{tpu_custom_call.1} parent=1 // pred_check
      _
    $region35: #{tpu_custom_call.1} parent=1 // pred_check_branch
      %56 = sbr.rel (0) target = $region37
    $region36: #{tpu_custom_call.1} parent=1 // pred_region
      _
    $region37: #{tpu_custom_call.1} parent=1 // pred_fallthru
      _
    // Predicated region
    $region38: #{tpu_custom_call.1} parent=1 // pred_check
      _
    $region39: #{tpu_custom_call.1} parent=1 // pred_check_branch
      %58 = sbr.rel (0) target = $region41
    $region40: #{tpu_custom_call.1} parent=1 // pred_region
      _
    $region41: #{tpu_custom_call.1} parent=1 // pred_fallthru
      _
    // Predicated region
    $region42: #{tpu_custom_call.1} parent=1 // pred_check
      _
    $region43: #{tpu_custom_call.1} parent=1 // pred_check_branch
      %60 = sbr.rel (0) target = $region45
    $region44: #{tpu_custom_call.1} parent=1 // pred_region
      _
    $region45: #{tpu_custom_call.1} parent=1 // pred_fallthru
      _
    // Predicated region
    $region46: #{tpu_custom_call.1} parent=1 // pred_check
      _
    $region47: #{tpu_custom_call.1} parent=1 // pred_check_branch
      %62 = sbr.rel (0) target = $region49
    $region48: #{tpu_custom_call.1} parent=1 // pred_region
      %63 = dma.done [#allocation3], 8192
    $region49: #{tpu_custom_call.1} parent=1 // pred_fallthru
      _
    // Predicated region
    $region50: #{tpu_custom_call.1} parent=1 // pred_check
      _
    $region51: #{tpu_custom_call.1} parent=1 // pred_check_branch
      %65 = sbr.rel (0) target = $region53
    $region52: #{tpu_custom_call.1} parent=1 // pred_region
      %66 = dma.done [#allocation6], 4096
    $region53: #{tpu_custom_call.1} parent=1 // pred_fallthru
      _
    %v68 = vld [vmem:[%s0] sm:$0xff]
    %v69 = vpack.c.bf16 %v68, %v68
    %v70 = vld [vmem:[%s1] sm:$0xff]
    %v71 = vld [vmem:[%s1 + $0x8] sm:$0xff]
    %v72 = vld [vmem:[%s2] sm:$0x3]
    %v74 = vlaneseq
    %v75 = vshrl.u32 %v74, 7
    %v76 = vsub.s32 0, %v75
    %v77 = vrot.slane %v72, %v76
    %v78 = vlaneseq
    %v79 = vshrl.u32 %v78, 7
    %v80 = vsub.s32 1, %v79
    %v81 = vrot.slane %v72, %v80
    %v86 = vunpack.c.l.b16 %v70
    %v87 = vunpack.c.h.b16 %v70
    %v88 = vunpack.c.l.b16 %v71
    %v89 = vunpack.c.h.b16 %v71
    %v90 = vpack.c.b16 %v88, %v86
    %v91 = vpack.c.b16 %v89, %v87
    %vm94 = vcmask 130048
    %v96 = vsel %vm94, %v69, 0
    %98 = vmatprep.subr.bf16.mxu0 %v91
    %99 = vmatpush1.bf16.msra.mxu0 %v90
    %100 = vmatprep.subr.bf16.mxu0 0
    %101 = vmatpush1.bf16.msra.mxu0 0
    %102 = vmatprep.subr.bf16.mxu0 0
    %103 = vmatpush1.bf16.msra.mxu0 0
    %104 = vmatprep.subr.bf16.mxu0 0
    %105 = vmatpush1.bf16.msra.mxu0 0
    %106 = vmatprep.subr.bf16.mxu0 0
    %107 = vmatpush1.bf16.msra.mxu0 0
    %108 = vmatprep.subr.bf16.mxu0 0
    %109 = vmatpush1.bf16.msra.mxu0 0
    %110 = vmatprep.subr.bf16.mxu0 0
    %111 = vmatpush1.bf16.msra.mxu0 0
    %112 = vmatprep.subr.bf16.mxu0 0
    %113 = vmatpush1.bf16.msra.mxu0 0
    %114 = vmatprep.subr.bf16.mxu0 0
    %115 = vmatpush1.bf16.msra.mxu0 0
    %116 = vmatprep.subr.bf16.mxu0 0
    %117 = vmatpush1.bf16.msra.mxu0 0
    %118 = vmatprep.subr.bf16.mxu0 0
    %119 = vmatpush1.bf16.msra.mxu0 0
    %120 = vmatprep.subr.bf16.mxu0 0
    %121 = vmatpush1.bf16.msra.mxu0 0
    %122 = vmatprep.subr.bf16.mxu0 0
    %123 = vmatpush1.bf16.msra.mxu0 0
    %124 = vmatprep.subr.bf16.mxu0 0
    %125 = vmatpush1.bf16.msra.mxu0 0
    %126 = vmatprep.subr.bf16.mxu0 0
    %127 = vmatpush1.bf16.msra.mxu0 0
    %128 = vmatprep.subr.bf16.mxu0 0
    %129 = vmatpush1.bf16.msra.mxu0 0
    %130 = vmatprep.mubr.bf16.mxu0 0
    %131 = vmatmul.mubr.bf16.gmra.mrb[0].mxu0 %v96
    %v132 = vpop.f32.mrb[0].mxu0
    %v133 = vadd.f32 %v77, %v132
    %v134 = vpop.f32.mrb[0].mxu0
    %v135 = vadd.f32 %v81, %v134
    %v136 = vpop.f32.mrb[0].mxu0
    %v137 = vpop.f32.mrb[0].mxu0
    %138 = vdwg.mxu0
    %v139 = vmax.f32 %v133, 0.0
    %v140 = vmax.f32 %v135, 0.0
    %v141 = vpack.c.bf16 %v139, %v139
    %v142 = vpack.c.bf16 %v140, %v140
    %v143 = vld [vmem:[#allocation2] sm:$0xff]
    %v144 = vld [vmem:[#allocation2 + $0x8] sm:$0xff]
    %v145 = vld [vmem:[#allocation2 + $0x10] sm:$0xff]
    %v146 = vld [vmem:[#allocation2 + $0x18] sm:$0xff]
    %v147 = vld [vmem:[#allocation2 + $0x20] sm:$0xff]
    %v148 = vld [vmem:[#allocation2 + $0x28] sm:$0xff]
    %v149 = vld [vmem:[#allocation2 + $0x30] sm:$0xff]
    %v150 = vld [vmem:[#allocation2 + $0x38] sm:$0xff]
    %v151 = vld [vmem:[#allocation2 + $0x40] sm:$0xff]
    %v152 = vld [vmem:[#allocation2 + $0x48] sm:$0xff]
    %v153 = vld [vmem:[#allocation2 + $0x50] sm:$0xff]
    %v154 = vld [vmem:[#allocation2 + $0x58] sm:$0xff]
    %v155 = vld [vmem:[#allocation2 + $0x60] sm:$0xff]
    %v156 = vld [vmem:[#allocation2 + $0x68] sm:$0xff]
    %v157 = vld [vmem:[#allocation2 + $0x70] sm:$0xff]
    %v158 = vld [vmem:[#allocation2 + $0x78] sm:$0xff]
    %v159 = vld [vmem:[#allocation2 + $0x80] sm:$0xff]
    %v160 = vld [vmem:[#allocation2 + $0x88] sm:$0xff]
    %v161 = vld [vmem:[#allocation2 + $0x90] sm:$0xff]
    %v162 = vld [vmem:[#allocation2 + $0x98] sm:$0xff]
    %v163 = vld [vmem:[#allocation2 + $0xa0] sm:$0xff]
    %v164 = vld [vmem:[#allocation2 + $0xa8] sm:$0xff]
    %v165 = vld [vmem:[#allocation2 + $0xb0] sm:$0xff]
    %v166 = vld [vmem:[#allocation2 + $0xb8] sm:$0xff]
    %v167 = vld [vmem:[#allocation2 + $0xc0] sm:$0xff]
    %v168 = vld [vmem:[#allocation2 + $0xc8] sm:$0xff]
    %v169 = vld [vmem:[#allocation2 + $0xd0] sm:$0xff]
    %v170 = vld [vmem:[#allocation2 + $0xd8] sm:$0xff]
    %v171 = vld [vmem:[#allocation2 + $0xe0] sm:$0xff]
    %v172 = vld [vmem:[#allocation2 + $0xe8] sm:$0xff]
    %v173 = vld [vmem:[#allocation2 + $0xf0] sm:$0xff]
    %v174 = vld [vmem:[#allocation2 + $0xf8] sm:$0xff]
    %v175 = vld [vmem:[#allocation2 + $0x100] sm:$0xff]
    %v176 = vld [vmem:[#allocation2 + $0x108] sm:$0xff]
    %v177 = vld [vmem:[#allocation2 + $0x110] sm:$0xff]
    %v178 = vld [vmem:[#allocation2 + $0x118] sm:$0xff]
    %v179 = vld [vmem:[#allocation2 + $0x120] sm:$0xff]
    %v180 = vld [vmem:[#allocation2 + $0x128] sm:$0xff]
    %v181 = vld [vmem:[#allocation2 + $0x130] sm:$0xff]
    %v182 = vld [vmem:[#allocation2 + $0x138] sm:$0xff]
    %v183 = vld [vmem:[#allocation2 + $0x140] sm:$0xff]
    %v184 = vld [vmem:[#allocation2 + $0x148] sm:$0xff]
    %v185 = vld [vmem:[#allocation2 + $0x150] sm:$0xff]
    %v186 = vld [vmem:[#allocation2 + $0x158] sm:$0xff]
    %v187 = vld [vmem:[#allocation2 + $0x160] sm:$0xff]
    %v188 = vld [vmem:[#allocation2 + $0x168] sm:$0xff]
    %v189 = vld [vmem:[#allocation2 + $0x170] sm:$0xff]
    %v190 = vld [vmem:[#allocation2 + $0x178] sm:$0xff]
    %v191 = vld [vmem:[#allocation2 + $0x180] sm:$0xff]
    %v192 = vld [vmem:[#allocation2 + $0x188] sm:$0xff]
    %v193 = vld [vmem:[#allocation2 + $0x190] sm:$0xff]
    %v194 = vld [vmem:[#allocation2 + $0x198] sm:$0xff]
    %v195 = vld [vmem:[#allocation2 + $0x1a0] sm:$0xff]
    %v196 = vld [vmem:[#allocation2 + $0x1a8] sm:$0xff]
    %v197 = vld [vmem:[#allocation2 + $0x1b0] sm:$0xff]
    %v198 = vld [vmem:[#allocation2 + $0x1b8] sm:$0xff]
    %v199 = vld [vmem:[#allocation2 + $0x1c0] sm:$0xff]
    %v200 = vld [vmem:[#allocation2 + $0x1c8] sm:$0xff]
    %v201 = vld [vmem:[#allocation2 + $0x1d0] sm:$0xff]
    %v202 = vld [vmem:[#allocation2 + $0x1d8] sm:$0xff]
    %v203 = vld [vmem:[#allocation2 + $0x1e0] sm:$0xff]
    %v204 = vld [vmem:[#allocation2 + $0x1e8] sm:$0xff]
    %v205 = vld [vmem:[#allocation2 + $0x1f0] sm:$0xff]
    %v206 = vld [vmem:[#allocation2 + $0x1f8] sm:$0xff]
    %v207 = vld [vmem:[%s4] sm:$0xf]
    %v209 = vlaneseq
    %v210 = vshrl.u32 %v209, 7
    %v211 = vsub.s32 0, %v210
    %v212 = vrot.slane %v207, %v211
    %v213 = vlaneseq
    %v214 = vshrl.u32 %v213, 7
    %v215 = vsub.s32 1, %v214
    %v216 = vrot.slane %v207, %v215
    %v217 = vlaneseq
    %v218 = vshrl.u32 %v217, 7
    %v219 = vsub.s32 2, %v218
    %v220 = vrot.slane %v207, %v219
    %v221 = vlaneseq
    %v222 = vshrl.u32 %v221, 7
    %v223 = vsub.s32 3, %v222
    %v224 = vrot.slane %v207, %v223
    %v293 = vunpack.c.l.b16 %v143
    %v294 = vunpack.c.h.b16 %v143
    %v295 = vunpack.c.l.b16 %v144
    %v296 = vunpack.c.h.b16 %v144
    %v297 = vunpack.c.l.b16 %v145
    %v298 = vunpack.c.h.b16 %v145
    %v299 = vunpack.c.l.b16 %v146
    %v300 = vunpack.c.h.b16 %v146
    %v301 = vunpack.c.l.b16 %v147
    %v302 = vunpack.c.h.b16 %v147
    %v303 = vunpack.c.l.b16 %v148
    %v304 = vunpack.c.h.b16 %v148
    %v305 = vunpack.c.l.b16 %v149
    %v306 = vunpack.c.h.b16 %v149
    %v307 = vunpack.c.l.b16 %v150
    %v308 = vunpack.c.h.b16 %v150
    %v309 = vunpack.c.l.b16 %v151
    %v310 = vunpack.c.h.b16 %v151
    %v311 = vunpack.c.l.b16 %v152
    %v312 = vunpack.c.h.b16 %v152
    %v313 = vunpack.c.l.b16 %v153
    %v314 = vunpack.c.h.b16 %v153
    %v315 = vunpack.c.l.b16 %v154
    %v316 = vunpack.c.h.b16 %v154
    %v317 = vunpack.c.l.b16 %v155
    %v318 = vunpack.c.h.b16 %v155
    %v319 = vunpack.c.l.b16 %v156
    %v320 = vunpack.c.h.b16 %v156
    %v321 = vunpack.c.l.b16 %v157
    %v322 = vunpack.c.h.b16 %v157
    %v323 = vunpack.c.l.b16 %v158
    %v324 = vunpack.c.h.b16 %v158
    %v325 = vunpack.c.l.b16 %v159
    %v326 = vunpack.c.h.b16 %v159
    %v327 = vunpack.c.l.b16 %v160
    %v328 = vunpack.c.h.b16 %v160
    %v329 = vunpack.c.l.b16 %v161
    %v330 = vunpack.c.h.b16 %v161
    %v331 = vunpack.c.l.b16 %v162
    %v332 = vunpack.c.h.b16 %v162
    %v333 = vunpack.c.l.b16 %v163
    %v334 = vunpack.c.h.b16 %v163
    %v335 = vunpack.c.l.b16 %v164
    %v336 = vunpack.c.h.b16 %v164
    %v337 = vunpack.c.l.b16 %v165
    %v338 = vunpack.c.h.b16 %v165
    %v339 = vunpack.c.l.b16 %v166
    %v340 = vunpack.c.h.b16 %v166
    %v341 = vunpack.c.l.b16 %v167
    %v342 = vunpack.c.h.b16 %v167
    %v343 = vunpack.c.l.b16 %v168
    %v344 = vunpack.c.h.b16 %v168
    %v345 = vunpack.c.l.b16 %v169
    %v346 = vunpack.c.h.b16 %v169
    %v347 = vunpack.c.l.b16 %v170
    %v348 = vunpack.c.h.b16 %v170
    %v349 = vunpack.c.l.b16 %v171
    %v350 = vunpack.c.h.b16 %v171
    %v351 = vunpack.c.l.b16 %v172
    %v352 = vunpack.c.h.b16 %v172
    %v353 = vunpack.c.l.b16 %v173
    %v354 = vunpack.c.h.b16 %v173
    %v355 = vunpack.c.l.b16 %v174
    %v356 = vunpack.c.h.b16 %v174
    %v357 = vunpack.c.l.b16 %v175
    %v358 = vunpack.c.h.b16 %v175
    %v359 = vunpack.c.l.b16 %v176
    %v360 = vunpack.c.h.b16 %v176
    %v361 = vunpack.c.l.b16 %v177
    %v362 = vunpack.c.h.b16 %v177
    %v363 = vunpack.c.l.b16 %v178
    %v364 = vunpack.c.h.b16 %v178
    %v365 = vunpack.c.l.b16 %v179
    %v366 = vunpack.c.h.b16 %v179
    %v367 = vunpack.c.l.b16 %v180
    %v368 = vunpack.c.h.b16 %v180
    %v369 = vunpack.c.l.b16 %v181
    %v370 = vunpack.c.h.b16 %v181
    %v371 = vunpack.c.l.b16 %v182
    %v372 = vunpack.c.h.b16 %v182
    %v373 = vunpack.c.l.b16 %v183
    %v374 = vunpack.c.h.b16 %v183
    %v375 = vunpack.c.l.b16 %v184
    %v376 = vunpack.c.h.b16 %v184
    %v377 = vunpack.c.l.b16 %v185
    %v378 = vunpack.c.h.b16 %v185
    %v379 = vunpack.c.l.b16 %v186
    %v380 = vunpack.c.h.b16 %v186
    %v381 = vunpack.c.l.b16 %v187
    %v382 = vunpack.c.h.b16 %v187
    %v383 = vunpack.c.l.b16 %v188
    %v384 = vunpack.c.h.b16 %v188
    %v385 = vunpack.c.l.b16 %v189
    %v386 = vunpack.c.h.b16 %v189
    %v387 = vunpack.c.l.b16 %v190
    %v388 = vunpack.c.h.b16 %v190
    %v389 = vunpack.c.l.b16 %v191
    %v390 = vunpack.c.h.b16 %v191
    %v391 = vunpack.c.l.b16 %v192
    %v392 = vunpack.c.h.b16 %v192
    %v393 = vunpack.c.l.b16 %v193
    %v394 = vunpack.c.h.b16 %v193
    %v395 = vunpack.c.l.b16 %v194
    %v396 = vunpack.c.h.b16 %v194
    %v397 = vunpack.c.l.b16 %v195
    %v398 = vunpack.c.h.b16 %v195
    %v399 = vunpack.c.l.b16 %v196
    %v400 = vunpack.c.h.b16 %v196
    %v401 = vunpack.c.l.b16 %v197
    %v402 = vunpack.c.h.b16 %v197
    %v403 = vunpack.c.l.b16 %v198
    %v404 = vunpack.c.h.b16 %v198
    %v405 = vunpack.c.l.b16 %v199
    %v406 = vunpack.c.h.b16 %v199
    %v407 = vunpack.c.l.b16 %v200
    %v408 = vunpack.c.h.b16 %v200
    %v409 = vunpack.c.l.b16 %v201
    %v410 = vunpack.c.h.b16 %v201
    %v411 = vunpack.c.l.b16 %v202
    %v412 = vunpack.c.h.b16 %v202
    %v413 = vunpack.c.l.b16 %v203
    %v414 = vunpack.c.h.b16 %v203
    %v415 = vunpack.c.l.b16 %v204
    %v416 = vunpack.c.h.b16 %v204
    %v417 = vunpack.c.l.b16 %v205
    %v418 = vunpack.c.h.b16 %v205
    %v419 = vunpack.c.l.b16 %v206
    %v420 = vunpack.c.h.b16 %v206
    %v421 = vpack.c.b16 %v297, %v293
    %v422 = vpack.c.b16 %v298, %v294
    %v423 = vpack.c.b16 %v299, %v295
    %v424 = vpack.c.b16 %v300, %v296
    %v425 = vpack.c.b16 %v305, %v301
    %v426 = vpack.c.b16 %v306, %v302
    %v427 = vpack.c.b16 %v307, %v303
    %v428 = vpack.c.b16 %v308, %v304
    %v429 = vpack.c.b16 %v313, %v309
    %v430 = vpack.c.b16 %v314, %v310
    %v431 = vpack.c.b16 %v315, %v311
    %v432 = vpack.c.b16 %v316, %v312
    %v433 = vpack.c.b16 %v321, %v317
    %v434 = vpack.c.b16 %v322, %v318
    %v435 = vpack.c.b16 %v323, %v319
    %v436 = vpack.c.b16 %v324, %v320
    %v437 = vpack.c.b16 %v329, %v325
    %v438 = vpack.c.b16 %v330, %v326
    %v439 = vpack.c.b16 %v331, %v327
    %v440 = vpack.c.b16 %v332, %v328
    %v441 = vpack.c.b16 %v337, %v333
    %v442 = vpack.c.b16 %v338, %v334
    %v443 = vpack.c.b16 %v339, %v335
    %v444 = vpack.c.b16 %v340, %v336
    %v445 = vpack.c.b16 %v345, %v341
    %v446 = vpack.c.b16 %v346, %v342
    %v447 = vpack.c.b16 %v347, %v343
    %v448 = vpack.c.b16 %v348, %v344
    %v449 = vpack.c.b16 %v353, %v349
    %v450 = vpack.c.b16 %v354, %v350
    %v451 = vpack.c.b16 %v355, %v351
    %v452 = vpack.c.b16 %v356, %v352
    %v453 = vpack.c.b16 %v361, %v357
    %v454 = vpack.c.b16 %v362, %v358
    %v455 = vpack.c.b16 %v363, %v359
    %v456 = vpack.c.b16 %v364, %v360
    %v457 = vpack.c.b16 %v369, %v365
    %v458 = vpack.c.b16 %v370, %v366
    %v459 = vpack.c.b16 %v371, %v367
    %v460 = vpack.c.b16 %v372, %v368
    %v461 = vpack.c.b16 %v377, %v373
    %v462 = vpack.c.b16 %v378, %v374
    %v463 = vpack.c.b16 %v379, %v375
    %v464 = vpack.c.b16 %v380, %v376
    %v465 = vpack.c.b16 %v385, %v381
    %v466 = vpack.c.b16 %v386, %v382
    %v467 = vpack.c.b16 %v387, %v383
    %v468 = vpack.c.b16 %v388, %v384
    %v469 = vpack.c.b16 %v393, %v389
    %v470 = vpack.c.b16 %v394, %v390
    %v471 = vpack.c.b16 %v395, %v391
    %v472 = vpack.c.b16 %v396, %v392
    %v473 = vpack.c.b16 %v401, %v397
    %v474 = vpack.c.b16 %v402, %v398
    %v475 = vpack.c.b16 %v403, %v399
    %v476 = vpack.c.b16 %v404, %v400
    %v477 = vpack.c.b16 %v409, %v405
    %v478 = vpack.c.b16 %v410, %v406
    %v479 = vpack.c.b16 %v411, %v407
    %v480 = vpack.c.b16 %v412, %v408
    %v481 = vpack.c.b16 %v417, %v413
    %v482 = vpack.c.b16 %v418, %v414
    %v483 = vpack.c.b16 %v419, %v415
    %v484 = vpack.c.b16 %v420, %v416
    %549 = vmatprep.subr.bf16.mxu0 %v422
    %550 = vmatpush1.bf16.msra.mxu0 %v421
    %551 = vmatprep.subr.bf16.mxu0 %v426
    %552 = vmatpush1.bf16.msra.mxu0 %v425
    %553 = vmatprep.subr.bf16.mxu0 %v430
    %554 = vmatpush1.bf16.msra.mxu0 %v429
    %555 = vmatprep.subr.bf16.mxu0 %v434
    %556 = vmatpush1.bf16.msra.mxu0 %v433
    %557 = vmatprep.subr.bf16.mxu0 %v438
    %558 = vmatpush1.bf16.msra.mxu0 %v437
    %559 = vmatprep.subr.bf16.mxu0 %v442
    %560 = vmatpush1.bf16.msra.mxu0 %v441
    %561 = vmatprep.subr.bf16.mxu0 %v446
    %562 = vmatpush1.bf16.msra.mxu0 %v445
    %563 = vmatprep.subr.bf16.mxu0 %v450
    %564 = vmatpush1.bf16.msra.mxu0 %v449
    %565 = vmatprep.subr.bf16.mxu0 %v454
    %566 = vmatpush1.bf16.msra.mxu0 %v453
    %567 = vmatprep.subr.bf16.mxu0 %v458
    %568 = vmatpush1.bf16.msra.mxu0 %v457
    %569 = vmatprep.subr.bf16.mxu0 %v462
    %570 = vmatpush1.bf16.msra.mxu0 %v461
    %571 = vmatprep.subr.bf16.mxu0 %v466
    %572 = vmatpush1.bf16.msra.mxu0 %v465
    %573 = vmatprep.subr.bf16.mxu0 %v470
    %574 = vmatpush1.bf16.msra.mxu0 %v469
    %575 = vmatprep.subr.bf16.mxu0 %v474
    %576 = vmatpush1.bf16.msra.mxu0 %v473
    %577 = vmatprep.subr.bf16.mxu0 %v478
    %578 = vmatpush1.bf16.msra.mxu0 %v477
    %579 = vmatprep.subr.bf16.mxu0 %v482
    %580 = vmatpush1.bf16.msra.mxu0 %v481
    %581 = vmatprep.mubr.bf16.mxu0 %v142
    %582 = vmatmul.mubr.bf16.gmra.mrb[0].mxu0 %v141
    %v583 = vpop.f32.mrb[0].mxu0
    %v584 = vadd.f32 %v212, %v583
    %v585 = vpop.f32.mrb[0].mxu0
    %v586 = vadd.f32 %v216, %v585
    %v587 = vpop.f32.mrb[0].mxu0
    %v588 = vpop.f32.mrb[0].mxu0
    %589 = vdwg.mxu0
    %590 = vmatprep.subr.bf16.mxu0 %v424
    %591 = vmatpush1.bf16.msra.mxu0 %v423
    %592 = vmatprep.subr.bf16.mxu0 %v428
    %593 = vmatpush1.bf16.msra.mxu0 %v427
    %594 = vmatprep.subr.bf16.mxu0 %v432
    %595 = vmatpush1.bf16.msra.mxu0 %v431
    %596 = vmatprep.subr.bf16.mxu0 %v436
    %597 = vmatpush1.bf16.msra.mxu0 %v435
    %598 = vmatprep.subr.bf16.mxu0 %v440
    %599 = vmatpush1.bf16.msra.mxu0 %v439
    %600 = vmatprep.subr.bf16.mxu0 %v444
    %601 = vmatpush1.bf16.msra.mxu0 %v443
    %602 = vmatprep.subr.bf16.mxu0 %v448
    %603 = vmatpush1.bf16.msra.mxu0 %v447
    %604 = vmatprep.subr.bf16.mxu0 %v452
    %605 = vmatpush1.bf16.msra.mxu0 %v451
    %606 = vmatprep.subr.bf16.mxu0 %v456
    %607 = vmatpush1.bf16.msra.mxu0 %v455
    %608 = vmatprep.subr.bf16.mxu0 %v460
    %609 = vmatpush1.bf16.msra.mxu0 %v459
    %610 = vmatprep.subr.bf16.mxu0 %v464
    %611 = vmatpush1.bf16.msra.mxu0 %v463
    %612 = vmatprep.subr.bf16.mxu0 %v468
    %613 = vmatpush1.bf16.msra.mxu0 %v467
    %614 = vmatprep.subr.bf16.mxu0 %v472
    %615 = vmatpush1.bf16.msra.mxu0 %v471
    %616 = vmatprep.subr.bf16.mxu0 %v476
    %617 = vmatpush1.bf16.msra.mxu0 %v475
    %618 = vmatprep.subr.bf16.mxu0 %v480
    %619 = vmatpush1.bf16.msra.mxu0 %v479
    %620 = vmatprep.subr.bf16.mxu0 %v484
    %621 = vmatpush1.bf16.msra.mxu0 %v483
    %622 = vmatprep.mubr.bf16.mxu0 %v142
    %623 = vmatmul.mubr.bf16.gmra.mrb[0].mxu0 %v141
    %v624 = vpop.f32.mrb[0].mxu0
    %v625 = vadd.f32 %v220, %v624
    %v626 = vpop.f32.mrb[0].mxu0
    %v627 = vadd.f32 %v224, %v626
    %v628 = vpop.f32.mrb[0].mxu0
    %v629 = vpop.f32.mrb[0].mxu0
    %630 = vdwg.mxu0
    %v631 = vmax.f32 %v584, 0.0
    %v632 = vmax.f32 %v586, 0.0
    %v633 = vmax.f32 %v625, 0.0
    %v634 = vmax.f32 %v627, 0.0
    %v635 = vpack.c.bf16 %v631, %v631
    %v636 = vpack.c.bf16 %v632, %v632
    %v637 = vpack.c.bf16 %v633, %v633
    %v638 = vpack.c.bf16 %v634, %v634
    %v639 = vld [vmem:[#allocation5] sm:$0xf]
    %v640 = vld [vmem:[#allocation5 + $0x4] sm:$0xf]
    %v641 = vld [vmem:[#allocation5 + $0x8] sm:$0xf]
    %v642 = vld [vmem:[#allocation5 + $0xc] sm:$0xf]
    %v643 = vld [vmem:[#allocation5 + $0x10] sm:$0xf]
    %v644 = vld [vmem:[#allocation5 + $0x14] sm:$0xf]
    %v645 = vld [vmem:[#allocation5 + $0x18] sm:$0xf]
    %v646 = vld [vmem:[#allocation5 + $0x1c] sm:$0xf]
    %v647 = vld [vmem:[#allocation5 + $0x20] sm:$0xf]
    %v648 = vld [vmem:[#allocation5 + $0x24] sm:$0xf]
    %v649 = vld [vmem:[#allocation5 + $0x28] sm:$0xf]
    %v650 = vld [vmem:[#allocation5 + $0x2c] sm:$0xf]
    %v651 = vld [vmem:[#allocation5 + $0x30] sm:$0xf]
    %v652 = vld [vmem:[#allocation5 + $0x34] sm:$0xf]
    %v653 = vld [vmem:[#allocation5 + $0x38] sm:$0xf]
    %v654 = vld [vmem:[#allocation5 + $0x3c] sm:$0xf]
    %v655 = vld [vmem:[#allocation5 + $0x40] sm:$0xf]
    %v656 = vld [vmem:[#allocation5 + $0x44] sm:$0xf]
    %v657 = vld [vmem:[#allocation5 + $0x48] sm:$0xf]
    %v658 = vld [vmem:[#allocation5 + $0x4c] sm:$0xf]
    %v659 = vld [vmem:[#allocation5 + $0x50] sm:$0xf]
    %v660 = vld [vmem:[#allocation5 + $0x54] sm:$0xf]
    %v661 = vld [vmem:[#allocation5 + $0x58] sm:$0xf]
    %v662 = vld [vmem:[#allocation5 + $0x5c] sm:$0xf]
    %v663 = vld [vmem:[#allocation5 + $0x60] sm:$0xf]
    %v664 = vld [vmem:[#allocation5 + $0x64] sm:$0xf]
    %v665 = vld [vmem:[#allocation5 + $0x68] sm:$0xf]
    %v666 = vld [vmem:[#allocation5 + $0x6c] sm:$0xf]
    %v667 = vld [vmem:[#allocation5 + $0x70] sm:$0xf]
    %v668 = vld [vmem:[#allocation5 + $0x74] sm:$0xf]
    %v669 = vld [vmem:[#allocation5 + $0x78] sm:$0xf]
    %v670 = vld [vmem:[#allocation5 + $0x7c] sm:$0xf]
    %v671 = vld [vmem:[#allocation5 + $0x80] sm:$0xf]
    %v672 = vld [vmem:[#allocation5 + $0x84] sm:$0xf]
    %v673 = vld [vmem:[#allocation5 + $0x88] sm:$0xf]
    %v674 = vld [vmem:[#allocation5 + $0x8c] sm:$0xf]
    %v675 = vld [vmem:[#allocation5 + $0x90] sm:$0xf]
    %v676 = vld [vmem:[#allocation5 + $0x94] sm:$0xf]
    %v677 = vld [vmem:[#allocation5 + $0x98] sm:$0xf]
    %v678 = vld [vmem:[#allocation5 + $0x9c] sm:$0xf]
    %v679 = vld [vmem:[#allocation5 + $0xa0] sm:$0xf]
    %v680 = vld [vmem:[#allocation5 + $0xa4] sm:$0xf]
    %v681 = vld [vmem:[#allocation5 + $0xa8] sm:$0xf]
    %v682 = vld [vmem:[#allocation5 + $0xac] sm:$0xf]
    %v683 = vld [vmem:[#allocation5 + $0xb0] sm:$0xf]
    %v684 = vld [vmem:[#allocation5 + $0xb4] sm:$0xf]
    %v685 = vld [vmem:[#allocation5 + $0xb8] sm:$0xf]
    %v686 = vld [vmem:[#allocation5 + $0xbc] sm:$0xf]
    %v687 = vld [vmem:[#allocation5 + $0xc0] sm:$0xf]
    %v688 = vld [vmem:[#allocation5 + $0xc4] sm:$0xf]
    %v689 = vld [vmem:[#allocation5 + $0xc8] sm:$0xf]
    %v690 = vld [vmem:[#allocation5 + $0xcc] sm:$0xf]
    %v691 = vld [vmem:[#allocation5 + $0xd0] sm:$0xf]
    %v692 = vld [vmem:[#allocation5 + $0xd4] sm:$0xf]
    %v693 = vld [vmem:[#allocation5 + $0xd8] sm:$0xf]
    %v694 = vld [vmem:[#allocation5 + $0xdc] sm:$0xf]
    %v695 = vld [vmem:[#allocation5 + $0xe0] sm:$0xf]
    %v696 = vld [vmem:[#allocation5 + $0xe4] sm:$0xf]
    %v697 = vld [vmem:[#allocation5 + $0xe8] sm:$0xf]
    %v698 = vld [vmem:[#allocation5 + $0xec] sm:$0xf]
    %v699 = vld [vmem:[#allocation5 + $0xf0] sm:$0xf]
    %v700 = vld [vmem:[#allocation5 + $0xf4] sm:$0xf]
    %v701 = vld [vmem:[#allocation5 + $0xf8] sm:$0xf]
    %v702 = vld [vmem:[#allocation5 + $0xfc] sm:$0xf]
    %v703 = vld [vmem:[%s6] sm:$0x1]
    %v705 = vlaneseq
    %v706 = vshrl.u32 %v705, 7
    %v707 = vsub.s32 0, %v706
    %v708 = vrot.slane %v703, %v707
    %v774 = vunpack.c.l.b16 %v639
    %v775 = vunpack.c.l.b16 %v640
    %v776 = vunpack.c.l.b16 %v641
    %v777 = vunpack.c.l.b16 %v642
    %v778 = vunpack.c.l.b16 %v643
    %v779 = vunpack.c.l.b16 %v644
    %v780 = vunpack.c.l.b16 %v645
    %v781 = vunpack.c.l.b16 %v646
    %v782 = vunpack.c.l.b16 %v647
    %v783 = vunpack.c.l.b16 %v648
    %v784 = vunpack.c.l.b16 %v649
    %v785 = vunpack.c.l.b16 %v650
    %v786 = vunpack.c.l.b16 %v651
    %v787 = vunpack.c.l.b16 %v652
    %v788 = vunpack.c.l.b16 %v653
    %v789 = vunpack.c.l.b16 %v654
    %v790 = vunpack.c.l.b16 %v655
    %v791 = vunpack.c.l.b16 %v656
    %v792 = vunpack.c.l.b16 %v657
    %v793 = vunpack.c.l.b16 %v658
    %v794 = vunpack.c.l.b16 %v659
    %v795 = vunpack.c.l.b16 %v660
    %v796 = vunpack.c.l.b16 %v661
    %v797 = vunpack.c.l.b16 %v662
    %v798 = vunpack.c.l.b16 %v663
    %v799 = vunpack.c.l.b16 %v664
    %v800 = vunpack.c.l.b16 %v665
    %v801 = vunpack.c.l.b16 %v666
    %v802 = vunpack.c.l.b16 %v667
    %v803 = vunpack.c.l.b16 %v668
    %v804 = vunpack.c.l.b16 %v669
    %v805 = vunpack.c.l.b16 %v670
    %v806 = vunpack.c.l.b16 %v671
    %v807 = vunpack.c.l.b16 %v672
    %v808 = vunpack.c.l.b16 %v673
    %v809 = vunpack.c.l.b16 %v674
    %v810 = vunpack.c.l.b16 %v675
    %v811 = vunpack.c.l.b16 %v676
    %v812 = vunpack.c.l.b16 %v677
    %v813 = vunpack.c.l.b16 %v678
    %v814 = vunpack.c.l.b16 %v679
    %v815 = vunpack.c.l.b16 %v680
    %v816 = vunpack.c.l.b16 %v681
    %v817 = vunpack.c.l.b16 %v682
    %v818 = vunpack.c.l.b16 %v683
    %v819 = vunpack.c.l.b16 %v684
    %v820 = vunpack.c.l.b16 %v685
    %v821 = vunpack.c.l.b16 %v686
    %v822 = vunpack.c.l.b16 %v687
    %v823 = vunpack.c.l.b16 %v688
    %v824 = vunpack.c.l.b16 %v689
    %v825 = vunpack.c.l.b16 %v690
    %v826 = vunpack.c.l.b16 %v691
    %v827 = vunpack.c.l.b16 %v692
    %v828 = vunpack.c.l.b16 %v693
    %v829 = vunpack.c.l.b16 %v694
    %v830 = vunpack.c.l.b16 %v695
    %v831 = vunpack.c.l.b16 %v696
    %v832 = vunpack.c.l.b16 %v697
    %v833 = vunpack.c.l.b16 %v698
    %v834 = vunpack.c.l.b16 %v699
    %v835 = vunpack.c.l.b16 %v700
    %v836 = vunpack.c.l.b16 %v701
    %v837 = vunpack.c.l.b16 %v702
    %v838 = vpack.c.b16 %v775, %v774
    %v839 = vpack.c.b16 %v777, %v776
    %v840 = vpack.c.b16 %v779, %v778
    %v841 = vpack.c.b16 %v781, %v780
    %v842 = vpack.c.b16 %v783, %v782
    %v843 = vpack.c.b16 %v785, %v784
    %v844 = vpack.c.b16 %v787, %v786
    %v845 = vpack.c.b16 %v789, %v788
    %v846 = vpack.c.b16 %v791, %v790
    %v847 = vpack.c.b16 %v793, %v792
    %v848 = vpack.c.b16 %v795, %v794
    %v849 = vpack.c.b16 %v797, %v796
    %v850 = vpack.c.b16 %v799, %v798
    %v851 = vpack.c.b16 %v801, %v800
    %v852 = vpack.c.b16 %v803, %v802
    %v853 = vpack.c.b16 %v805, %v804
    %v854 = vpack.c.b16 %v807, %v806
    %v855 = vpack.c.b16 %v809, %v808
    %v856 = vpack.c.b16 %v811, %v810
    %v857 = vpack.c.b16 %v813, %v812
    %v858 = vpack.c.b16 %v815, %v814
    %v859 = vpack.c.b16 %v817, %v816
    %v860 = vpack.c.b16 %v819, %v818
    %v861 = vpack.c.b16 %v821, %v820
    %v862 = vpack.c.b16 %v823, %v822
    %v863 = vpack.c.b16 %v825, %v824
    %v864 = vpack.c.b16 %v827, %v826
    %v865 = vpack.c.b16 %v829, %v828
    %v866 = vpack.c.b16 %v831, %v830
    %v867 = vpack.c.b16 %v833, %v832
    %v868 = vpack.c.b16 %v835, %v834
    %v869 = vpack.c.b16 %v837, %v836
    %902 = vmatprep.subr.bf16.mxu0 0
    %903 = vmatpush1.bf16.msra.mxu0 %v838
    %904 = vmatprep.subr.bf16.mxu0 0
    %905 = vmatpush1.bf16.msra.mxu0 %v839
    %906 = vmatprep.subr.bf16.mxu0 0
    %907 = vmatpush1.bf16.msra.mxu0 %v840
    %908 = vmatprep.subr.bf16.mxu0 0
    %909 = vmatpush1.bf16.msra.mxu0 %v841
    %910 = vmatprep.subr.bf16.mxu0 0
    %911 = vmatpush1.bf16.msra.mxu0 %v842
    %912 = vmatprep.subr.bf16.mxu0 0
    %913 = vmatpush1.bf16.msra.mxu0 %v843
    %914 = vmatprep.subr.bf16.mxu0 0
    %915 = vmatpush1.bf16.msra.mxu0 %v844
    %916 = vmatprep.subr.bf16.mxu0 0
    %917 = vmatpush1.bf16.msra.mxu0 %v845
    %918 = vmatprep.subr.bf16.mxu0 0
    %919 = vmatpush1.bf16.msra.mxu0 %v846
    %920 = vmatprep.subr.bf16.mxu0 0
    %921 = vmatpush1.bf16.msra.mxu0 %v847
    %922 = vmatprep.subr.bf16.mxu0 0
    %923 = vmatpush1.bf16.msra.mxu0 %v848
    %924 = vmatprep.subr.bf16.mxu0 0
    %925 = vmatpush1.bf16.msra.mxu0 %v849
    %926 = vmatprep.subr.bf16.mxu0 0
    %927 = vmatpush1.bf16.msra.mxu0 %v850
    %928 = vmatprep.subr.bf16.mxu0 0
    %929 = vmatpush1.bf16.msra.mxu0 %v851
    %930 = vmatprep.subr.bf16.mxu0 0
    %931 = vmatpush1.bf16.msra.mxu0 %v852
    %932 = vmatprep.subr.bf16.mxu0 0
    %933 = vmatpush1.bf16.msra.mxu0 %v853
    %934 = vmatprep.mubr.bf16.mxu0 %v636
    %935 = vmatmul.mubr.bf16.gmra.mrb[0].mxu0 %v635
    %v936 = vpop.f32.mrb[0].mxu0
    %v937 = vadd.f32 %v708, %v936
    %v938 = vpop.f32.mrb[0].mxu0
    %v939 = vpop.f32.mrb[0].mxu0
    %v940 = vpop.f32.mrb[0].mxu0
    %941 = vdwg.mxu0
    %942 = vmatprep.subr.bf16.mxu0 0
    %943 = vmatpush1.bf16.msra.mxu0 %v854
    %944 = vmatprep.subr.bf16.mxu0 0
    %945 = vmatpush1.bf16.msra.mxu0 %v855
    %946 = vmatprep.subr.bf16.mxu0 0
    %947 = vmatpush1.bf16.msra.mxu0 %v856
    %948 = vmatprep.subr.bf16.mxu0 0
    %949 = vmatpush1.bf16.msra.mxu0 %v857
    %950 = vmatprep.subr.bf16.mxu0 0
    %951 = vmatpush1.bf16.msra.mxu0 %v858
    %952 = vmatprep.subr.bf16.mxu0 0
    %953 = vmatpush1.bf16.msra.mxu0 %v859
    %954 = vmatprep.subr.bf16.mxu0 0
    %955 = vmatpush1.bf16.msra.mxu0 %v860
    %956 = vmatprep.subr.bf16.mxu0 0
    %957 = vmatpush1.bf16.msra.mxu0 %v861
    %958 = vmatprep.subr.bf16.mxu0 0
    %959 = vmatpush1.bf16.msra.mxu0 %v862
    %960 = vmatprep.subr.bf16.mxu0 0
    %961 = vmatpush1.bf16.msra.mxu0 %v863
    %962 = vmatprep.subr.bf16.mxu0 0
    %963 = vmatpush1.bf16.msra.mxu0 %v864
    %964 = vmatprep.subr.bf16.mxu0 0
    %965 = vmatpush1.bf16.msra.mxu0 %v865
    %966 = vmatprep.subr.bf16.mxu0 0
    %967 = vmatpush1.bf16.msra.mxu0 %v866
    %968 = vmatprep.subr.bf16.mxu0 0
    %969 = vmatpush1.bf16.msra.mxu0 %v867
    %970 = vmatprep.subr.bf16.mxu0 0
    %971 = vmatpush1.bf16.msra.mxu0 %v868
    %972 = vmatprep.subr.bf16.mxu0 0
    %973 = vmatpush1.bf16.msra.mxu0 %v869
    %974 = vmatprep.mubr.bf16.mxu0 %v638
    %975 = vmatmul.mubr.bf16.gmra.mrb[0].mxu0 %v637
    %v976 = vpop.f32.mrb[0].mxu0
    %v977 = vadd.f32 %v937, %v976
    %v978 = vpop.f32.mrb[0].mxu0
    %v979 = vpop.f32.mrb[0].mxu0
    %v980 = vpop.f32.mrb[0].mxu0
    %981 = vdwg.mxu0
    %v982 = vmax.f32 %v977, 0.0
    %v983 = vpack.c.bf16 %v982, %v982
    %v984 = vld [vmem:[%s7] sm:$0xf]
    %v985 = vld [vmem:[%s7 + $0x4] sm:$0xf]
    %v986 = vld [vmem:[%s7 + $0x8] sm:$0xf]
    %v987 = vld [vmem:[%s7 + $0xc] sm:$0xf]
    %v988 = vld [vmem:[%s7 + $0x10] sm:$0xf]
    %v989 = vld [vmem:[%s7 + $0x14] sm:$0xf]
    %v990 = vld [vmem:[%s7 + $0x18] sm:$0xf]
    %v991 = vld [vmem:[%s7 + $0x1c] sm:$0xf]
    %v992 = vld [vmem:[%s7 + $0x20] sm:$0xf]
    %v993 = vld [vmem:[%s7 + $0x24] sm:$0xf]
    %v994 = vld [vmem:[%s7 + $0x28] sm:$0xf]
    %v995 = vld [vmem:[%s7 + $0x2c] sm:$0xf]
    %v996 = vld [vmem:[%s7 + $0x30] sm:$0xf]
    %v997 = vld [vmem:[%s7 + $0x34] sm:$0xf]
    %v998 = vld [vmem:[%s7 + $0x38] sm:$0xf]
    %v999 = vld [vmem:[%s7 + $0x3c] sm:$0xf]
    %v1000 = vld [vmem:[%s8] sm:$0x1]
    %v1002 = vlaneseq
    %v1003 = vshrl.u32 %v1002, 7
    %v1004 = vsub.s32 0, %v1003
    %v1005 = vrot.slane %v1000, %v1004
    %v1023 = vunpack.c.l.b16 %v984
    %v1024 = vunpack.c.l.b16 %v985
    %v1025 = vunpack.c.l.b16 %v986
    %v1026 = vunpack.c.l.b16 %v987
    %v1027 = vunpack.c.l.b16 %v988
    %v1028 = vunpack.c.l.b16 %v989
    %v1029 = vunpack.c.l.b16 %v990
    %v1030 = vunpack.c.l.b16 %v991
    %v1031 = vunpack.c.l.b16 %v992
    %v1032 = vunpack.c.l.b16 %v993
    %v1033 = vunpack.c.l.b16 %v994
    %v1034 = vunpack.c.l.b16 %v995
    %v1035 = vunpack.c.l.b16 %v996
    %v1036 = vunpack.c.l.b16 %v997
    %v1037 = vunpack.c.l.b16 %v998
    %v1038 = vunpack.c.l.b16 %v999
    %v1039 = vpack.c.b16 %v1024, %v1023
    %v1040 = vpack.c.b16 %v1026, %v1025
    %v1041 = vpack.c.b16 %v1028, %v1027
    %v1042 = vpack.c.b16 %v1030, %v1029
    %v1043 = vpack.c.b16 %v1032, %v1031
    %v1044 = vpack.c.b16 %v1034, %v1033
    %v1045 = vpack.c.b16 %v1036, %v1035
    %v1046 = vpack.c.b16 %v1038, %v1037
    %1055 = vmatprep.subr.bf16.mxu0 0
    %1056 = vmatpush1.bf16.msra.mxu0 %v1039
    %1057 = vmatprep.subr.bf16.mxu0 0
    %1058 = vmatpush1.bf16.msra.mxu0 %v1040
    %1059 = vmatprep.subr.bf16.mxu0 0
    %1060 = vmatpush1.bf16.msra.mxu0 %v1041
    %1061 = vmatprep.subr.bf16.mxu0 0
    %1062 = vmatpush1.bf16.msra.mxu0 %v1042
    %1063 = vmatprep.subr.bf16.mxu0 0
    %1064 = vmatpush1.bf16.msra.mxu0 %v1043
    %1065 = vmatprep.subr.bf16.mxu0 0
    %1066 = vmatpush1.bf16.msra.mxu0 %v1044
    %1067 = vmatprep.subr.bf16.mxu0 0
    %1068 = vmatpush1.bf16.msra.mxu0 %v1045
    %1069 = vmatprep.subr.bf16.mxu0 0
    %1070 = vmatpush1.bf16.msra.mxu0 %v1046
    %1071 = vmatprep.subr.bf16.mxu0 0
    %1072 = vmatpush1.bf16.msra.mxu0 0
    %1073 = vmatprep.subr.bf16.mxu0 0
    %1074 = vmatpush1.bf16.msra.mxu0 0
    %1075 = vmatprep.subr.bf16.mxu0 0
    %1076 = vmatpush1.bf16.msra.mxu0 0
    %1077 = vmatprep.subr.bf16.mxu0 0
    %1078 = vmatpush1.bf16.msra.mxu0 0
    %1079 = vmatprep.subr.bf16.mxu0 0
    %1080 = vmatpush1.bf16.msra.mxu0 0
    %1081 = vmatprep.subr.bf16.mxu0 0
    %1082 = vmatpush1.bf16.msra.mxu0 0
    %1083 = vmatprep.subr.bf16.mxu0 0
    %1084 = vmatpush1.bf16.msra.mxu0 0
    %1085 = vmatprep.subr.bf16.mxu0 0
    %1086 = vmatpush1.bf16.msra.mxu0 0
    %1087 = vmatprep.mubr.bf16.mxu0 0
    %1088 = vmatmul.mubr.bf16.gmra.mrb[0].mxu0 %v983
    %v1089 = vpop.f32.mrb[0].mxu0
    %v1090 = vadd.f32 %v1005, %v1089
    %v1091 = vpop.f32.mrb[0].mxu0
    %v1092 = vpop.f32.mrb[0].mxu0
    %v1093 = vpop.f32.mrb[0].mxu0
    %1094 = vdwg.mxu0
    %v1095 = vmax.f32 %v1090, 0.0
    %v1096 = vpack.c.bf16 %v1095, %v1095
    %v1097 = vld [vmem:[%s9] sm:$0xf]
    %v1098 = vld [vmem:[%s9 + $0x4] sm:$0xf]
    %v1099 = vld [vmem:[%s9 + $0x8] sm:$0xf]
    %v1100 = vld [vmem:[%s9 + $0xc] sm:$0xf]
    %v1101 = vld [vmem:[%s9 + $0x10] sm:$0xf]
    %v1102 = vld [vmem:[%s9 + $0x14] sm:$0xf]
    %v1103 = vld [vmem:[%s9 + $0x18] sm:$0xf]
    %v1104 = vld [vmem:[%s9 + $0x1c] sm:$0xf]
    %v1105 = vld [vmem:[%s10] sm:$0x1]
    %v1107 = vlaneseq
    %v1108 = vshrl.u32 %v1107, 7
    %v1109 = vsub.s32 0, %v1108
    %v1110 = vrot.slane %v1105, %v1109
    %v1120 = vunpack.c.l.b16 %v1097
    %v1121 = vunpack.c.l.b16 %v1098
    %v1122 = vunpack.c.l.b16 %v1099
    %v1123 = vunpack.c.l.b16 %v1100
    %v1124 = vunpack.c.l.b16 %v1101
    %v1125 = vunpack.c.l.b16 %v1102
    %v1126 = vunpack.c.l.b16 %v1103
    %v1127 = vunpack.c.l.b16 %v1104
    %v1128 = vpack.c.b16 %v1121, %v1120
    %v1129 = vpack.c.b16 %v1123, %v1122
    %v1130 = vpack.c.b16 %v1125, %v1124
    %v1131 = vpack.c.b16 %v1127, %v1126
    %vm1136 = vcmask 523264
    %v1138 = vsel %vm1136, %v1096, 0
    %1140 = vmatprep.subr.bf16.mxu0 0
    %1141 = vmatpush1.bf16.msra.mxu0 %v1128
    %1142 = vmatprep.subr.bf16.mxu0 0
    %1143 = vmatpush1.bf16.msra.mxu0 %v1129
    %1144 = vmatprep.subr.bf16.mxu0 0
    %1145 = vmatpush1.bf16.msra.mxu0 %v1130
    %1146 = vmatprep.subr.bf16.mxu0 0
    %1147 = vmatpush1.bf16.msra.mxu0 %v1131
    %1148 = vmatprep.subr.bf16.mxu0 0
    %1149 = vmatpush1.bf16.msra.mxu0 0
    %1150 = vmatprep.subr.bf16.mxu0 0
    %1151 = vmatpush1.bf16.msra.mxu0 0
    %1152 = vmatprep.subr.bf16.mxu0 0
    %1153 = vmatpush1.bf16.msra.mxu0 0
    %1154 = vmatprep.subr.bf16.mxu0 0
    %1155 = vmatpush1.bf16.msra.mxu0 0
    %1156 = vmatprep.subr.bf16.mxu0 0
    %1157 = vmatpush1.bf16.msra.mxu0 0
    %1158 = vmatprep.subr.bf16.mxu0 0
    %1159 = vmatpush1.bf16.msra.mxu0 0
    %1160 = vmatprep.subr.bf16.mxu0 0
    %1161 = vmatpush1.bf16.msra.mxu0 0
    %1162 = vmatprep.subr.bf16.mxu0 0
    %1163 = vmatpush1.bf16.msra.mxu0 0
    %1164 = vmatprep.subr.bf16.mxu0 0
    %1165 = vmatpush1.bf16.msra.mxu0 0
    %1166 = vmatprep.subr.bf16.mxu0 0
    %1167 = vmatpush1.bf16.msra.mxu0 0
    %1168 = vmatprep.subr.bf16.mxu0 0
    %1169 = vmatpush1.bf16.msra.mxu0 0
    %1170 = vmatprep.subr.bf16.mxu0 0
    %1171 = vmatpush1.bf16.msra.mxu0 0
    %1172 = vmatprep.mubr.bf16.mxu0 0
    %1173 = vmatmul.mubr.bf16.gmra.mrb[0].mxu0 %v1138
    %v1174 = vpop.f32.mrb[0].mxu0
    %v1175 = vadd.f32 %v1110, %v1174
    %v1176 = vpop.f32.mrb[0].mxu0
    %v1177 = vpop.f32.mrb[0].mxu0
    %v1178 = vpop.f32.mrb[0].mxu0
    %1179 = vdwg.mxu0
    %v1180 = vsub.f32 0.0, %v1175
    %v1181 = vmul.f32 %v1180, 1.442695
    %v1182 = vpow.pop %v1181
    %v1183 = vadd.f32 %v1182, 1.0
    %v1184 = vrcp.pop %v1183
    %v1185 = vpack.c.bf16 %v1184, %v1184
    %1186 = vst [vmem:[#allocation7] sm:$0xf] %v1185
    // Predicated region
    $region54: #{tpu_custom_call.1} parent=1 // pred_check
      _
    $region55: #{tpu_custom_call.1} parent=1 // pred_check_branch
      %1188 = sbr.rel (0) target = $region57
    $region56: #{tpu_custom_call.1} parent=1 // pred_region
      %s1190 = ssub.s32 64, 64
      %1191 = vsyncadd [#allocation4], %s1190
      %s1193 = sshll.u32 [#allocation7], 4
      %s1194 = int_to_ptr.vmem [resolvable:$true] %s1193
      %1196 = dma.vmem_to_hbm [thread:$0]  %s1194, 64, %s11, [#allocation4]
    $region57: #{tpu_custom_call.1} parent=1 // pred_fallthru
      _
    // Predicated region
    $region58: #{tpu_custom_call.1} parent=1 // pred_check
      _
    $region59: #{tpu_custom_call.1} parent=1 // pred_check_branch
      %1198 = sbr.rel (0) target = $region61
    $region60: #{tpu_custom_call.1} parent=1 // pred_region
      %1199 = dma.done [#allocation4], 64
    $region61: #{tpu_custom_call.1} parent=1 // pred_fallthru
      _
    %1200 = vsyncpa [#allocation3], 1
    %1201 = vsyncpa [#allocation6], 1
    %1202 = vsyncpa [#allocation4], 1

</llo_original>
